<compile_context>
chip_gen: v5e
topology: v5e:2x2
jax: 0.10.0
libtpu: 0.0.40
codegen_flags: <defaults>
</compile_context>

<pallas_src>
import math

import jax
import jax.numpy as jnp
from jax import lax
from jax.experimental import pallas as pl
from jax.experimental.pallas import tpu as pltpu


def _round_up(x, m):
    return ((x + m - 1) // m) * m


def _vmem_capacity_bytes():
    """Physical per-core VMEM (v5e/v6e: 128 MiB, v7x: 64 MiB); conservative fallback."""
    try:
        cap = getattr(pltpu.get_tpu_info(), "vmem_capacity_bytes", None)
        if cap:
            return int(cap)
    except Exception:
        pass
    return 64 << 20


def _dot_precision(dtype):
    # f32 matmuls are multi-pass on the MXU; HIGHEST keeps full f32 accuracy.
    # bf16 is the native fast path -> default precision.
    return lax.Precision.HIGHEST if dtype == jnp.float32 else lax.Precision.DEFAULT


# ----------------------------- kernels --------------------------------------

def ffn_kernel_fused(x_ref, w1_ref, b1_ref, w2_ref, b2_ref, o_ref):
    """Small-FFN fast path: full (padded) hidden dim resident, no reduction axis."""
    prec = _dot_precision(x_ref.dtype)
    h = jnp.dot(x_ref[...], w1_ref[...],
                preferred_element_type=jnp.float32, precision=prec)
    h = jnp.maximum(h + b1_ref[...], 0.0)
    y = jnp.dot(h.astype(w2_ref.dtype), w2_ref[...],
                preferred_element_type=jnp.float32, precision=prec)
    o_ref[...] = (y + b2_ref[...]).astype(o_ref.dtype)


def ffn_kernel_tiled_f32out(x_ref, w1_ref, b1_ref, w2_ref, b2_ref, o_ref):
    """Hidden-tiled path, f32 output: accumulate directly into o_ref (no scratch)."""
    h_idx = pl.program_id(1)
    prec = _dot_precision(x_ref.dtype)

    @pl.when(h_idx == 0)
    def _():
        o_ref[...] = jnp.broadcast_to(b2_ref[...], o_ref.shape)

    h = jnp.dot(x_ref[...], w1_ref[...],
                preferred_element_type=jnp.float32, precision=prec)
    h = jnp.maximum(h + b1_ref[...], 0.0)
    o_ref[...] += jnp.dot(h.astype(w2_ref.dtype), w2_ref[...],
                          preferred_element_type=jnp.float32, precision=prec)


def ffn_kernel_tiled_scratch(x_ref, w1_ref, b1_ref, w2_ref, b2_ref, o_ref, acc_ref):
    """Hidden-tiled path, non-f32 output: f32 VMEM accumulator, cast on last step."""
    h_idx = pl.program_id(1)
    prec = _dot_precision(x_ref.dtype)

    @pl.when(h_idx == 0)
    def _():
        acc_ref[...] = jnp.broadcast_to(b2_ref[...], acc_ref.shape)

    h = jnp.dot(x_ref[...], w1_ref[...],
                preferred_element_type=jnp.float32, precision=prec)
    h = jnp.maximum(h + b1_ref[...], 0.0)
    acc_ref[...] += jnp.dot(h.astype(w2_ref.dtype), w2_ref[...],
                            preferred_element_type=jnp.float32, precision=prec)

    @pl.when(h_idx == pl.num_programs(1) - 1)
    def _():
        o_ref[...] = acc_ref[...].astype(o_ref.dtype)


# ------------------- factory: weight prep hoisted out of per-call path ------

def make_feed_forward(w1, b1, w2, b2, *, compute_dtype=jnp.bfloat16,
                      tm=None, th=None, force_tiled=False):
    """Build a jitted apply(x) = relu(x @ w1 + b1) @ w2 + b2.

    w1: (C, H), b1: (H,), w2: (H, C), b2: (C,)   (PyTorch weights pre-transposed).
    Weights are cast/padded ONCE here; each call only pads x.
    """
    C, H = w1.shape
    assert w2.shape == (H, C) and b1.shape == (H,) and b2.shape == (C,)

    compute_dtype = jnp.dtype(compute_dtype)
    itemsize = compute_dtype.itemsize
    sublane = 16 if compute_dtype == jnp.bfloat16 else 8

    Cp = _round_up(C, 128)              # lane-dense feature axis (unmasked vst)
    Hp_full = _round_up(H, 128)

    vmem_cap = _vmem_capacity_bytes()
    budget = int(0.80 * vmem_cap)

    # Row tile sized to the generation's VMEM: wider tile on 128 MiB parts
    # raises arithmetic intensity on the weight stream (MXU-bound, not HBM-bound).
    if tm is None:
        tm = 512 if vmem_cap >= (96 << 20) else 256
    tm = max(sublane, _round_up(tm, sublane))

    # Worst-case per-row-tile VMEM: double-buffered x & out (f32 out) + f32 acc.
    row_tile_bytes = tm * Cp * (2 * itemsize + 2 * 4 + 4)

    # Fast path: both (padded) weight matrices resident in VMEM.
    resident_w_bytes = 2 * 2 * Cp * Hp_full * itemsize + 2 * (Hp_full + Cp) * 4
    use_fast = (not force_tiled) and (resident_w_bytes + row_tile_bytes <= budget)

    if use_fast:
        Hp = Hp_full
        th_sel = Hp_full
    else:
        if th is None:
            avail = budget - row_tile_bytes - 2 * (Hp_full + Cp) * 4
            th = (avail // (4 * Cp * itemsize)) // 128 * 128   # 2x dbl-buffered W1+W2 tiles
            th = min(max(th, 128), 2048)
        th_sel = min(max(128, _round_up(th, 128)), Hp_full)
        Hp = _round_up(H, th_sel)

    # One-time weight prep (zero-padded rows/cols are mathematically inert).
    w1p = jnp.pad(w1.astype(compute_dtype), ((0, Cp - C), (0, Hp - H)))
    w2p = jnp.pad(w2.astype(compute_dtype), ((0, Hp - H), (0, Cp - C)))
    b1p = jnp.pad(b1.astype(jnp.float32), (0, Hp - H)).reshape(1, Hp)
    b2p = jnp.pad(b2.astype(jnp.float32), (0, Cp - C)).reshape(1, Cp)

    def apply(x):
        orig_shape = x.shape
        assert orig_shape[-1] == C
        out_dtype = x.dtype
        out_isz = jnp.dtype(out_dtype).itemsize
        M = math.prod(orig_shape[:-1])

        # Per-call row tiling; keep >= 2 row tiles when possible so both v7x
        # TensorCores get work on the "parallel" M axis.
        tm_eff = min(tm, _round_up(M, sublane))
        if _round_up(M, tm_eff) // tm_eff < 2 and M > sublane:
            tm_eff = _round_up((M + 1) // 2, sublane)
        Mp = _round_up(M, tm_eff)
        n_row_tiles = Mp // tm_eff

        x2d = jnp.pad(x.reshape(M, C).astype(compute_dtype),
                      ((0, Mp - M), (0, Cp - C)))

        if use_fast:
            grid = (n_row_tiles,)
            in_specs = [
                pl.BlockSpec((tm_eff, Cp), lambda i: (i, 0)),    # x row tile
                pl.BlockSpec((Cp, Hp), lambda i: (0, 0)),        # W1 (resident)
                pl.BlockSpec((1, Hp), lambda i: (0, 0)),         # b1 (resident)
                pl.BlockSpec((Hp, Cp), lambda i: (0, 0)),        # W2 (resident)
                pl.BlockSpec((1, Cp), lambda i: (0, 0)),         # b2 (resident)
            ]
            out_specs = pl.BlockSpec((tm_eff, Cp), lambda i: (i, 0))
            kernel, scratch = ffn_kernel_fused, []
            semantics = ("parallel",)
            working = (2 * tm_eff * Cp * itemsize
                       + 2 * 2 * Cp * Hp * itemsize
                       + 2 * (Hp + Cp) * 4
                       + 2 * tm_eff * Cp * out_isz)
            weight_reads = (w1p.size + w2p.size) * itemsize
        else:
            grid = (n_row_tiles, Hp // th_sel)     # rows parallel, hidden reduction last
            in_specs = [
                pl.BlockSpec((tm_eff, Cp), lambda i, h: (i, 0)),   # x reused over h
                pl.BlockSpec((Cp, th_sel), lambda i, h: (0, h)),   # W1 hidden tile
                pl.BlockSpec((1, th_sel), lambda i, h: (0, h)),    # b1 hidden tile
                pl.BlockSpec((th_sel, Cp), lambda i, h: (h, 0)),   # W2 hidden tile
                pl.BlockSpec((1, Cp), lambda i, h: (0, 0)),        # b2 constant block
            ]
            out_specs = pl.BlockSpec((tm_eff, Cp), lambda i, h: (i, 0))
            if out_dtype == jnp.float32:
                kernel, scratch, acc_bytes = ffn_kernel_tiled_f32out, [], 0
            else:
                kernel = ffn_kernel_tiled_scratch
                scratch = [pltpu.VMEM((tm_eff, Cp), jnp.float32)]
                acc_bytes = tm_eff * Cp * 4
            semantics = ("parallel", "arbitrary")
            working = (2 * tm_eff * Cp * itemsize
                       + 2 * 2 * Cp * th_sel * itemsize
                       + 2 * (th_sel + Cp) * 4
                       + 2 * tm_eff * Cp * out_isz
                       + acc_bytes)
            weight_reads = (w1p.size + w2p.size) * itemsize * n_row_tiles

        # Clamp the VMEM limit to the real physical capacity (v7x: 64 MiB).
        vmem_limit = int(min(max(working + (4 << 20), 32 << 20),
                             int(0.92 * vmem_cap)))

        cost = pl.CostEstimate(
            flops=4 * M * C * H,                  # two matmuls
            transcendentals=0,
            bytes_accessed=int(x2d.size * itemsize + weight_reads
                               + (b1p.size + b2p.size) * 4
                               + Mp * Cp * out_isz))

        out2d = pl.pallas_call(
            kernel,
            out_shape=jax.ShapeDtypeStruct((Mp, Cp), out_dtype),
            grid_spec=pltpu.PrefetchScalarGridSpec(
                num_scalar_prefetch=0,
                grid=grid,
                in_specs=in_specs,
                out_specs=out_specs,
                scratch_shapes=scratch),
            compiler_params=pltpu.CompilerParams(
                dimension_semantics=semantics,
                vmem_limit_bytes=vmem_limit),
            cost_estimate=cost,
        )(x2d, w1p, b1p, w2p, b2p)

        return out2d[:M, :C].reshape(orig_shape)

    return jax.jit(apply)


if __name__ == "__main__":
    key = jax.random.PRNGKey(0)

    # --- Config 1: FeedForward(input_size=32, output_size=128), x = (B, T, C) ---
    B, T = 2, 8
    input_size, output_size = 32, 128
    kx, k1, k2, k3, k4, key = jax.random.split(key, 6)

    x = jax.random.normal(kx, (B, T, input_size), jnp.float32)
    # PyTorch Linear convention: W is (out, in); transpose to (in, out) for the kernel.
    w1 = (jax.random.normal(k1, (output_size, input_size), jnp.float32) * 0.02).T
    b1 = jax.random.normal(k2, (output_size,), jnp.float32) * 0.02
    w2 = (jax.random.normal(k3, (input_size, output_size), jnp.float32) * 0.02).T
    b2 = jax.random.normal(k4, (input_size,), jnp.float32) * 0.02

    ref = jnp.maximum(x @ w1 + b1, 0.0) @ w2 + b2

    # f32 compute (HIGHEST-precision matmuls), small-FFN fast path.
    ffn_f32 = make_feed_forward(w1, b1, w2, b2, compute_dtype=jnp.float32)
    out = jax.block_until_ready(ffn_f32(x))
    assert out.shape == (B, T, input_size)
    assert jnp.allclose(out, ref, atol=1e-5, rtol=1e-5)

    # Default bf16 compute path (f32 accumulation inside).
    ffn_bf16 = make_feed_forward(w1, b1, w2, b2)
    out_bf16 = jax.block_until_ready(ffn_bf16(x))
    assert out_bf16.shape == (B, T, input_size)
    assert jnp.allclose(out_bf16, ref, atol=5e-2, rtol=5e-2)

    # --- Config 2: exercise the hidden-tiled reduction path (2 h-steps) ---
    input_size2, output_size2 = 64, 256
    kx2, k5, k6, k7, k8 = jax.random.split(key, 5)
    x2 = jax.random.normal(kx2, (B, T, input_size2), jnp.float32)
    w1b = (jax.random.normal(k5, (output_size2, input_size2), jnp.float32) * 0.02).T
    b1b = jax.random.normal(k6, (output_size2,), jnp.float32) * 0.02
    w2b = (jax.random.normal(k7, (input_size2, output_size2), jnp.float32) * 0.02).T
    b2b = jax.random.normal(k8, (input_size2,), jnp.float32) * 0.02
    ref2 = jnp.maximum(x2 @ w1b + b1b, 0.0) @ w2b + b2b

    # f32 output -> accumulate directly into the output tile (no scratch).
    ffn_t_f32 = make_feed_forward(w1b, b1b, w2b, b2b, compute_dtype=jnp.float32,
                                  force_tiled=True, th=128)
    out_t = jax.block_until_ready(ffn_t_f32(x2))
    assert jnp.allclose(out_t, ref2, atol=1e-5, rtol=1e-5)

    # bf16 output -> f32 VMEM scratch accumulator path.
    ffn_t_bf16 = make_feed_forward(w1b, b1b, w2b, b2b, force_tiled=True, th=128)
    out_t_bf16 = jax.block_until_ready(ffn_t_bf16(x2.astype(jnp.bfloat16)))
    assert out_t_bf16.dtype == jnp.bfloat16
    assert jnp.allclose(out_t_bf16.astype(jnp.float32), ref2, atol=5e-2, rtol=5e-2)

    print("KERNEL_OK")
</pallas_src>

<mosaic_0001>
module attributes {stable_mosaic.version = 11 : i64} {
  func.func @ffn_kernel_fused(%arg0: i32, %arg1: memref<8x128xf32, #tpu.memory_space<vmem>>, %arg2: memref<128x128xf32, #tpu.memory_space<vmem>>, %arg3: memref<1x128xf32, #tpu.memory_space<vmem>>, %arg4: memref<128x128xf32, #tpu.memory_space<vmem>>, %arg5: memref<1x128xf32, #tpu.memory_space<vmem>>, %arg6: memref<8x128xf32, #tpu.memory_space<vmem>>) attributes {dimension_semantics = [#tpu.dimension_semantics<parallel>], iteration_bounds = array<i64: 2>, scalar_prefetch = 0 : i64, scratch_operands = 0 : i64, tpu.core_type = #tpu.core_type<tc>, window_params = [{transform_indices = @transform_0, window_bounds = array<i64: 8, 128>}, {pipeline_mode = #tpu.pipeline_mode<synchronous>, transform_indices = @transform_1, window_bounds = array<i64: 128, 128>}, {pipeline_mode = #tpu.pipeline_mode<synchronous>, transform_indices = @transform_2, window_bounds = array<i64: 1, 128>}, {pipeline_mode = #tpu.pipeline_mode<synchronous>, transform_indices = @transform_3, window_bounds = array<i64: 128, 128>}, {pipeline_mode = #tpu.pipeline_mode<synchronous>, transform_indices = @transform_4, window_bounds = array<i64: 1, 128>}, {transform_indices = @transform_5, window_bounds = array<i64: 8, 128>}]} {
    %c0 = arith.constant 0 : index
    %c0_0 = arith.constant 0 : index
    %0 = vector.load %arg1[%c0, %c0_0] : memref<8x128xf32, #tpu.memory_space<vmem>>, vector<8x128xf32>
    %c0_1 = arith.constant 0 : index
    %c0_2 = arith.constant 0 : index
    %1 = vector.load %arg2[%c0_1, %c0_2] : memref<128x128xf32, #tpu.memory_space<vmem>>, vector<128x128xf32>
    %cst = arith.constant dense<0.000000e+00> : vector<8x128xf32>
    %2 = tpu.matmul %0, %1, %cst {dimension_numbers = #tpu.dot_dimension_numbers<[1], [0], [0], [1], [0, 0, 1, 1], [], []>, precision = #tpu.contract_precision<fp32>} : vector<8x128xf32>, vector<128x128xf32>, vector<8x128xf32> -> vector<8x128xf32>
    %c0_3 = arith.constant 0 : index
    %c0_4 = arith.constant 0 : index
    %3 = vector.load %arg3[%c0_3, %c0_4] : memref<1x128xf32, #tpu.memory_space<vmem>>, vector<1x128xf32>
    %4 = vector.broadcast %3 : vector<1x128xf32> to vector<8x128xf32>
    %5 = arith.addf %2, %4 : vector<8x128xf32>
    %cst_5 = arith.constant 0.000000e+00 : f32
    %6 = vector.broadcast %cst_5 : f32 to vector<8x128xf32>
    %7 = arith.maximumf %5, %6 : vector<8x128xf32>
    %c0_6 = arith.constant 0 : index
    %c0_7 = arith.constant 0 : index
    %8 = vector.load %arg4[%c0_6, %c0_7] : memref<128x128xf32, #tpu.memory_space<vmem>>, vector<128x128xf32>
    %cst_8 = arith.constant dense<0.000000e+00> : vector<8x128xf32>
    %9 = tpu.matmul %7, %8, %cst_8 {dimension_numbers = #tpu.dot_dimension_numbers<[1], [0], [0], [1], [0, 0, 1, 1], [], []>, precision = #tpu.contract_precision<fp32>} : vector<8x128xf32>, vector<128x128xf32>, vector<8x128xf32> -> vector<8x128xf32>
    %c0_9 = arith.constant 0 : index
    %c0_10 = arith.constant 0 : index
    %10 = vector.load %arg5[%c0_9, %c0_10] : memref<1x128xf32, #tpu.memory_space<vmem>>, vector<1x128xf32>
    %11 = vector.broadcast %10 : vector<1x128xf32> to vector<8x128xf32>
    %12 = arith.addf %9, %11 : vector<8x128xf32>
    %c0_11 = arith.constant 0 : index
    %c0_12 = arith.constant 0 : index
    %13 = vector.load %arg6[%c0_11, %c0_12] : memref<8x128xf32, #tpu.memory_space<vmem>>, vector<8x128xf32>
    tpu.vector_store %arg6[%c0_11, %c0_12], %12 {strides = array<i32>} : memref<8x128xf32, #tpu.memory_space<vmem>>, vector<8x128xf32>,
    return
  }
  func.func @transform_0(%arg0: i32) -> (i32, i32) {
    %c0_i32 = arith.constant 0 : i32
    %c0_i32_0 = arith.constant 0 : i32
    return %arg0, %c0_i32 : i32, i32
  }
  func.func @transform_1(%arg0: i32) -> (i32, i32) {
    %c0_i32 = arith.constant 0 : i32
    %c0_i32_0 = arith.constant 0 : i32
    %c0_i32_1 = arith.constant 0 : i32
    return %c0_i32, %c0_i32_0 : i32, i32
  }
  func.func @transform_2(%arg0: i32) -> (i32, i32) {
    %c0_i32 = arith.constant 0 : i32
    %c0_i32_0 = arith.constant 0 : i32
    %c0_i32_1 = arith.constant 0 : i32
    return %c0_i32, %c0_i32_0 : i32, i32
  }
  func.func @transform_3(%arg0: i32) -> (i32, i32) {
    %c0_i32 = arith.constant 0 : i32
    %c0_i32_0 = arith.constant 0 : i32
    %c0_i32_1 = arith.constant 0 : i32
    return %c0_i32, %c0_i32_0 : i32, i32
  }
  func.func @transform_4(%arg0: i32) -> (i32, i32) {
    %c0_i32 = arith.constant 0 : i32
    %c0_i32_0 = arith.constant 0 : i32
    %c0_i32_1 = arith.constant 0 : i32
    return %c0_i32, %c0_i32_0 : i32, i32
  }
  func.func @transform_5(%arg0: i32) -> (i32, i32) {
    %c0_i32 = arith.constant 0 : i32
    %c0_i32_0 = arith.constant 0 : i32
    return %arg0, %c0_i32 : i32, i32
  }
}

</mosaic_0001>

<llo_original>
// kernel: apply.1
$region0: #{apply.1}
  #allocation0 [shape = 'u32[]', space=smem, size = 0x4, offset = 0x4, fixed_abs, tag = 'smem constant byte address 0x4 - core index']
  #allocation1 [shape = 'u32[72,128]{1,0:T(1,128)}', space=vmem, size = 0x9000, scoped, tag = 'internal scratch']
  %s0 = inlined_call_operand.vmem [shape: f32[16,128], index: 0, kind: input, shape index: {}]
  %s1 = inlined_call_operand.hbm [shape: f32[128,128], index: 1, kind: input, shape index: {}]
  %s2 = inlined_call_operand.vmem [shape: f32[1,128], index: 2, kind: input, shape index: {}]
  %s3 = inlined_call_operand.hbm [shape: f32[128,128], index: 3, kind: input, shape index: {}]
  %s4 = inlined_call_operand.vmem [shape: f32[1,128], index: 4, kind: input, shape index: {}]
  %s5 = inlined_call_operand.vmem [shape: f32[16,128], index: 5, kind: output, shape index: {}]
  %s6 = sld [smem:[#allocation0]]
  $region61: #{apply.1} parent=0
    _
  %s8 = ssub.s32 1, %s6
  %s9 = scalar_select 0, %s8, %s6
  $region1: #{apply.1} parent=0
    #allocation2 [shape = 'u8[65536]{0}', space=vmem, size = 0x10000, scoped, tag = 'input window, operand 1, single buffered']
    #allocation3 [shape = 's32[2]{0}', space=sflag, size = 0x8, scoped, tag = 'scoped memory for apply.1']
    #allocation4 [shape = 'u8[65536]{0}', space=vmem, size = 0x10000, scoped, tag = 'input window, operand 3, single buffered']
    #allocation5 [shape = 's32[1]{0}', space=sflag, size = 0x4, scoped, tag = 'scoped memory for apply.1']
    %10 = vsyncpa [#allocation3], 0
    %11 = vsyncpa [#allocation5], 0
    loop: start=0, step=1, limit=4
    $region2: #{apply.1} parent=1 // loop_pre_header
      _
    $region3: #{apply.1} parent=1 // loop_header
      %s13 = sphi 0, %s17
      %p14 = scmp.ge.s32.totalorder %s13, 4
      %s23 = sphi 0, %s25
      %s26 = sphi 0, %s23
      %s27 = sphi 0, %s26
      %s43 = sphi 0, %s27
      %s47 = sphi 0, %s47
      %s49 = sphi 0, %s47
      %s50 = sphi 0, %s49
      %s64 = sphi 0, %s50
      %s68 = sphi 0, %s68
      %s70 = sphi 0, %s68
      %s71 = sphi 0, %s70
      %s85 = sphi 0, %s71
      %s89 = sphi 0, %s89
      %s91 = sphi 0, %s89
      %s92 = sphi 0, %s91
      %s106 = sphi 0, %s92
      %s110 = sphi 0, %s110
      %s112 = sphi 0, %s110
      %s113 = sphi 0, %s112
      %s127 = sphi 0, %s113
      %s133 = sphi 0, %s135
      %s136 = sphi 0, %s133
      %s137 = sphi 0, %s136
      %s153 = sphi 0, %s137
    $region4: #{apply.1} parent=1 // loop_header_branch
      %16 = sbr.rel (%p14) target = $region8
    $region5: #{apply.1} parent=1 // loop_body
      %s18 = ssub.s32 %s13, 1
      %s19 = ssub.s32 %s13, 2
      %s20 = sadd.s32 %s13, 1
      %s21 = ssub.s32 %s13, %s20
      %p22 = scmp.eq.s32.totalorder %s21, 0
      %s24 = sadd.s32 %s23, 1
      %s25 = scalar_select %p22, %s23, %s24
      %p28 = pneg %p22
      %p29 = scmp.eq.s32.totalorder %s13, 1
      %p30 = por %p28, %p29
      %p31 = scmp.ne.s32.totalorder %s23, %s26
      %p32 = scmp.eq.s32.totalorder %s13, 0
      %p33 = por %p31, %p32
      %p34 = scmp.ne.s32.totalorder %s23, %s26
      %p35 = scmp.eq.s32.totalorder %s18, 1
      %p36 = por %p34, %p35
      %p37 = scmp.ne.s32.totalorder %s26, %s27
      %p38 = scmp.eq.s32.totalorder %s18, 0
      %p39 = por %p37, %p38
      %p40 = scmp.ne.s32.totalorder %s26, %s27
      %p41 = scmp.eq.s32.totalorder %s19, 1
      %p42 = por %p40, %p41
      %p44 = scmp.ne.s32.totalorder %s27, %s43
      %p45 = scmp.eq.s32.totalorder %s19, 0
      %p46 = por %p44, %p45
      %s48 = sadd.s32 %s47, 1
      %p51 = scmp.eq.s32.totalorder %s13, 1
      %p52 = scmp.ne.s32.totalorder %s47, %s49
      %p53 = scmp.eq.s32.totalorder %s13, 0
      %p54 = por %p52, %p53
      %p55 = scmp.ne.s32.totalorder %s47, %s49
      %p56 = scmp.eq.s32.totalorder %s18, 1
      %p57 = por %p55, %p56
      %p58 = scmp.ne.s32.totalorder %s49, %s50
      %p59 = scmp.eq.s32.totalorder %s18, 0
      %p60 = por %p58, %p59
      %p61 = scmp.ne.s32.totalorder %s49, %s50
      %p62 = scmp.eq.s32.totalorder %s19, 1
      %p63 = por %p61, %p62
      %p65 = scmp.ne.s32.totalorder %s50, %s64
      %p66 = scmp.eq.s32.totalorder %s19, 0
      %p67 = por %p65, %p66
      %s69 = sadd.s32 %s68, 1
      %p72 = scmp.eq.s32.totalorder %s13, 1
      %p73 = scmp.ne.s32.totalorder %s68, %s70
      %p74 = scmp.eq.s32.totalorder %s13, 0
      %p75 = por %p73, %p74
      %p76 = scmp.ne.s32.totalorder %s68, %s70
      %p77 = scmp.eq.s32.totalorder %s18, 1
      %p78 = por %p76, %p77
      %p79 = scmp.ne.s32.totalorder %s70, %s71
      %p80 = scmp.eq.s32.totalorder %s18, 0
      %p81 = por %p79, %p80
      %p82 = scmp.ne.s32.totalorder %s70, %s71
      %p83 = scmp.eq.s32.totalorder %s19, 1
      %p84 = por %p82, %p83
      %p86 = scmp.ne.s32.totalorder %s71, %s85
      %p87 = scmp.eq.s32.totalorder %s19, 0
      %p88 = por %p86, %p87
      %s90 = sadd.s32 %s89, 1
      %p93 = scmp.eq.s32.totalorder %s13, 1
      %p94 = scmp.ne.s32.totalorder %s89, %s91
      %p95 = scmp.eq.s32.totalorder %s13, 0
      %p96 = por %p94, %p95
      %p97 = scmp.ne.s32.totalorder %s89, %s91
      %p98 = scmp.eq.s32.totalorder %s18, 1
      %p99 = por %p97, %p98
      %p100 = scmp.ne.s32.totalorder %s91, %s92
      %p101 = scmp.eq.s32.totalorder %s18, 0
      %p102 = por %p100, %p101
      %p103 = scmp.ne.s32.totalorder %s91, %s92
      %p104 = scmp.eq.s32.totalorder %s19, 1
      %p105 = por %p103, %p104
      %p107 = scmp.ne.s32.totalorder %s92, %s106
      %p108 = scmp.eq.s32.totalorder %s19, 0
      %p109 = por %p107, %p108
      %s111 = sadd.s32 %s110, 1
      %p114 = scmp.eq.s32.totalorder %s13, 1
      %p115 = scmp.ne.s32.totalorder %s110, %s112
      %p116 = scmp.eq.s32.totalorder %s13, 0
      %p117 = por %p115, %p116
      %p118 = scmp.ne.s32.totalorder %s110, %s112
      %p119 = scmp.eq.s32.totalorder %s18, 1
      %p120 = por %p118, %p119
      %p121 = scmp.ne.s32.totalorder %s112, %s113
      %p122 = scmp.eq.s32.totalorder %s18, 0
      %p123 = por %p121, %p122
      %p124 = scmp.ne.s32.totalorder %s112, %s113
      %p125 = scmp.eq.s32.totalorder %s19, 1
      %p126 = por %p124, %p125
      %p128 = scmp.ne.s32.totalorder %s113, %s127
      %p129 = scmp.eq.s32.totalorder %s19, 0
      %p130 = por %p128, %p129
      %s131 = ssub.s32 %s13, %s20
      %p132 = scmp.eq.s32.totalorder %s131, 0
      %s134 = sadd.s32 %s133, 1
      %s135 = scalar_select %p132, %s133, %s134
      %p138 = pneg %p132
      %p139 = scmp.eq.s32.totalorder %s13, 1
      %p140 = por %p138, %p139
      %p141 = scmp.ne.s32.totalorder %s133, %s136
      %p142 = scmp.eq.s32.totalorder %s13, 0
      %p143 = por %p141, %p142
      %p144 = scmp.ne.s32.totalorder %s133, %s136
      %p145 = scmp.eq.s32.totalorder %s18, 1
      %p146 = por %p144, %p145
      %p147 = scmp.ne.s32.totalorder %s136, %s137
      %p148 = scmp.eq.s32.totalorder %s18, 0
      %p149 = por %p147, %p148
      %p150 = scmp.ne.s32.totalorder %s136, %s137
      %p151 = scmp.eq.s32.totalorder %s19, 1
      %p152 = por %p150, %p151
      %p154 = scmp.ne.s32.totalorder %s137, %s153
      %p155 = scmp.eq.s32.totalorder %s19, 0
      %p156 = por %p154, %p155
      %p157 = scmp.le.s32.totalorder 1, %s13
      %p158 = scmp.lt.s32.totalorder %s13, 3
      %p159 = pnand %p157, %p158
      %p160 = pneg %p159
      // Predicated region
      $region9: #{apply.1} parent=5 // pred_check
        _
      $region10: #{apply.1} parent=5 // pred_check_branch
        %162 = sbr.rel (%p159) target = $region12
      $region11: #{apply.1} parent=5 // pred_region
        %s163 = ssub.s32 %s13, 1
        // Predicated region
        $region13: #{apply.1} parent=11 // pred_check
          %p164 = pneg %p60
        $region14: #{apply.1} parent=11 // pred_check_branch
          %166 = sbr.rel (%p164) target = $region16
        $region15: #{apply.1} parent=11 // pred_region
          %168 = vsyncadd [#allocation3], 0
          %s169 = sshll.u32 %s1, 4
          %s170 = int_to_ptr.hbm [resolvable:$true] %s169
          %s171 = sshll.u32 [#allocation2], 4
          %s172 = int_to_ptr.vmem [resolvable:$true] %s171
          %177 = dma.hbm_to_vmem [thread:$0]  %s170, 2048, %s172, [#allocation3], 128, 128, 8
        $region16: #{apply.1} parent=11 // pred_fallthru
          _
        // Predicated region
        $region17: #{apply.1} parent=11 // pred_check
          %p178 = pneg %p81
        $region18: #{apply.1} parent=11 // pred_check_branch
          %180 = sbr.rel (%p178) target = $region20
        $region19: #{apply.1} parent=11 // pred_region
          _
        $region20: #{apply.1} parent=11 // pred_fallthru
          _
        // Predicated region
        $region21: #{apply.1} parent=11 // pred_check
          %p181 = pneg %p102
        $region22: #{apply.1} parent=11 // pred_check_branch
          %183 = sbr.rel (%p181) target = $region24
        $region23: #{apply.1} parent=11 // pred_region
          %185 = vsyncadd [#allocation5], 0
          %s186 = sshll.u32 %s3, 4
          %s187 = int_to_ptr.hbm [resolvable:$true] %s186
          %s188 = sshll.u32 [#allocation4], 4
          %s189 = int_to_ptr.vmem [resolvable:$true] %s188
          %194 = dma.hbm_to_vmem [thread:$0]  %s187, 2048, %s189, [#allocation5], 128, 128, 8
        $region24: #{apply.1} parent=11 // pred_fallthru
          _
        // Predicated region
        $region25: #{apply.1} parent=11 // pred_check
          %p195 = pneg %p123
        $region26: #{apply.1} parent=11 // pred_check_branch
          %197 = sbr.rel (%p195) target = $region28
        $region27: #{apply.1} parent=11 // pred_region
          _
        $region28: #{apply.1} parent=11 // pred_fallthru
          _
      $region12: #{apply.1} parent=5 // pred_fallthru
        _
      %p198 = scmp.lt.s32.totalorder %s13, 2
      // Predicated region
      $region29: #{apply.1} parent=5 // pred_check
        %p199 = pneg %p198
      $region30: #{apply.1} parent=5 // pred_check_branch
        %201 = sbr.rel (%p199) target = $region32
      $region31: #{apply.1} parent=5 // pred_region
        // Predicated region
        $region33: #{apply.1} parent=31 // pred_check
          %p202 = pneg %p33
        $region34: #{apply.1} parent=31 // pred_check_branch
          %204 = sbr.rel (%p202) target = $region36
        $region35: #{apply.1} parent=31 // pred_region
          %p205 = scmp.lt.s32.totalorder %s13, 1
          %s206 = scalar_select %p205, %s13, 1
          %s207 = smul.addr %s206, 8
          %s208 = scalar_lea.vmem %s0, %s207
        $region36: #{apply.1} parent=31 // pred_fallthru
          _
      $region32: #{apply.1} parent=5 // pred_fallthru
        _
      %p209 = scmp.le.s32.totalorder 1, %s13
      %p210 = scmp.lt.s32.totalorder %s13, 3
      %p211 = pnand %p209, %p210
      %p212 = pneg %p211
      // Predicated region
      $region37: #{apply.1} parent=5 // pred_check
        _
      $region38: #{apply.1} parent=5 // pred_check_branch
        %214 = sbr.rel (%p211) target = $region40
      $region39: #{apply.1} parent=5 // pred_region
        %s215 = ssub.s32 %s13, 1
        // Predicated region
        $region41: #{apply.1} parent=39 // pred_check
          %p216 = pneg %p60
        $region42: #{apply.1} parent=39 // pred_check_branch
          %218 = sbr.rel (%p216) target = $region44
        $region43: #{apply.1} parent=39 // pred_region
          %220 = dma.done [#allocation3], 2048
        $region44: #{apply.1} parent=39 // pred_fallthru
          _
        // Predicated region
        $region45: #{apply.1} parent=39 // pred_check
          %p221 = pneg %p102
        $region46: #{apply.1} parent=39 // pred_check_branch
          %223 = sbr.rel (%p221) target = $region48
        $region47: #{apply.1} parent=39 // pred_region
          %225 = dma.done [#allocation5], 2048
        $region48: #{apply.1} parent=39 // pred_fallthru
          _
        %p226 = scmp.lt.s32.totalorder %s18, 1
        %s227 = scalar_select %p226, %s18, 1
        %s228 = smul.addr %s227, 8
        %s229 = scalar_lea.vmem %s0, %s228
        %p230 = pneg %p39
        %p231 = pneg %p36
        %p232 = pneg %p60
        %p233 = pneg %p57
        %p234 = pneg %p81
        %p235 = pneg %p78
        %p236 = pneg %p102
        %p237 = pneg %p99
        %p238 = pneg %p123
        %p239 = pneg %p120
        %p240 = pneg %p149
        %p241 = pneg %p146
        %p242 = scmp.lt.s32.totalorder %s18, 1
        %s243 = scalar_select %p242, %s18, 1
        %s244 = smul.addr %s243, 8
        %s245 = scalar_lea.vmem %s5, %s244
        %p246 = scmp.lt.s32.totalorder %s18, 1
        %s247 = scalar_select %p246, %s18, 1
        %s248 = smul.addr %s247, 8
        %s249 = scalar_lea.vmem %s0, %s248
        %p250 = scmp.lt.s32.totalorder %s18, 1
        %s251 = scalar_select %p250, %s18, 1
        %s252 = smul.addr %s251, 8
        %s253 = scalar_lea.vmem %s5, %s252
        %v254 = vld [vmem:[%s249] sm:$0xff]
        %v255 = vld [vmem:[#allocation2] sm:$0xff]
        %v256 = vld [vmem:[#allocation2 + $0x8] sm:$0xff]
        %v257 = vld [vmem:[#allocation2 + $0x10] sm:$0xff]
        %v258 = vld [vmem:[#allocation2 + $0x18] sm:$0xff]
        %v259 = vld [vmem:[#allocation2 + $0x20] sm:$0xff]
        %v260 = vld [vmem:[#allocation2 + $0x28] sm:$0xff]
        %v261 = vld [vmem:[#allocation2 + $0x30] sm:$0xff]
        %v262 = vld [vmem:[#allocation2 + $0x38] sm:$0xff]
        %v263 = vld [vmem:[#allocation2 + $0x40] sm:$0xff]
        %v264 = vld [vmem:[#allocation2 + $0x48] sm:$0xff]
        %v265 = vld [vmem:[#allocation2 + $0x50] sm:$0xff]
        %v266 = vld [vmem:[#allocation2 + $0x58] sm:$0xff]
        %v267 = vld [vmem:[#allocation2 + $0x60] sm:$0xff]
        %v268 = vld [vmem:[#allocation2 + $0x68] sm:$0xff]
        %v269 = vld [vmem:[#allocation2 + $0x70] sm:$0xff]
        %v270 = vld [vmem:[#allocation2 + $0x78] sm:$0xff]
        %v271 = vld [vmem:[%s2] sm:$0x1]
        %v273 = vperm.slane %v271, 0
        %v275 = vand.u32 %v270, 4294901760
        %276 = vmatpush.msra.mxu0 %v275
        %v277 = vand.u32 %v269, 4294901760
        %278 = vmatpush.msra.mxu0 %v277
        %v279 = vand.u32 %v268, 4294901760
        %280 = vmatpush.msra.mxu0 %v279
        %v281 = vand.u32 %v267, 4294901760
        %282 = vmatpush.msra.mxu0 %v281
        %v283 = vand.u32 %v266, 4294901760
        %284 = vmatpush.msra.mxu0 %v283
        %v285 = vand.u32 %v265, 4294901760
        %286 = vmatpush.msra.mxu0 %v285
        %v287 = vand.u32 %v264, 4294901760
        %288 = vmatpush.msra.mxu0 %v287
        %v289 = vand.u32 %v263, 4294901760
        %290 = vmatpush.msra.mxu0 %v289
        %v291 = vand.u32 %v262, 4294901760
        %292 = vmatpush.msra.mxu0 %v291
        %v293 = vand.u32 %v261, 4294901760
        %294 = vmatpush.msra.mxu0 %v293
        %v295 = vand.u32 %v260, 4294901760
        %296 = vmatpush.msra.mxu0 %v295
        %v297 = vand.u32 %v259, 4294901760
        %298 = vmatpush.msra.mxu0 %v297
        %v299 = vand.u32 %v258, 4294901760
        %300 = vmatpush.msra.mxu0 %v299
        %v301 = vand.u32 %v257, 4294901760
        %302 = vmatpush.msra.mxu0 %v301
        %v303 = vand.u32 %v256, 4294901760
        %304 = vmatpush.msra.mxu0 %v303
        %v305 = vand.u32 %v255, 4294901760
        %306 = vmatpush.msra.mxu0 %v305
        %v307 = vand.u32 %v254, 4294901760
        %v308 = vsub.f32 %v254, %v307
        %v309 = vand.u32 %v308, 4294901760
        %v310 = vsub.f32 %v308, %v309
        %v311 = vand.u32 %v310, 4294901760
        %312 = vmatmul.f32.gmra.mxu0 %v311
        %v313 = vpop.f32.mrf.mxu0
        %v314 = vadd.f32 %v273, %v313
        %315 = vdwg.mxu0
        %v316 = vand.u32 %v270, 4294901760
        %v317 = vsub.f32 %v270, %v316
        %v318 = vand.u32 %v317, 4294901760
        %v319 = vsub.f32 %v317, %v318
        %v320 = vand.u32 %v319, 4294901760
        %321 = vmatpush.msra.mxu0 %v320
        %v322 = vand.u32 %v269, 4294901760
        %v323 = vsub.f32 %v269, %v322
        %v324 = vand.u32 %v323, 4294901760
        %v325 = vsub.f32 %v323, %v324
        %v326 = vand.u32 %v325, 4294901760
        %327 = vmatpush.msra.mxu0 %v326
        %v328 = vand.u32 %v268, 4294901760
        %v329 = vsub.f32 %v268, %v328
        %v330 = vand.u32 %v329, 4294901760
        %v331 = vsub.f32 %v329, %v330
        %v332 = vand.u32 %v331, 4294901760
        %333 = vmatpush.msra.mxu0 %v332
        %v334 = vand.u32 %v267, 4294901760
        %v335 = vsub.f32 %v267, %v334
        %v336 = vand.u32 %v335, 4294901760
        %v337 = vsub.f32 %v335, %v336
        %v338 = vand.u32 %v337, 4294901760
        %339 = vmatpush.msra.mxu0 %v338
        %v340 = vand.u32 %v266, 4294901760
        %v341 = vsub.f32 %v266, %v340
        %v342 = vand.u32 %v341, 4294901760
        %v343 = vsub.f32 %v341, %v342
        %v344 = vand.u32 %v343, 4294901760
        %345 = vmatpush.msra.mxu0 %v344
        %v346 = vand.u32 %v265, 4294901760
        %v347 = vsub.f32 %v265, %v346
        %v348 = vand.u32 %v347, 4294901760
        %v349 = vsub.f32 %v347, %v348
        %v350 = vand.u32 %v349, 4294901760
        %351 = vmatpush.msra.mxu0 %v350
        %v352 = vand.u32 %v264, 4294901760
        %v353 = vsub.f32 %v264, %v352
        %v354 = vand.u32 %v353, 4294901760
        %v355 = vsub.f32 %v353, %v354
        %v356 = vand.u32 %v355, 4294901760
        %357 = vmatpush.msra.mxu0 %v356
        %v358 = vand.u32 %v263, 4294901760
        %v359 = vsub.f32 %v263, %v358
        %v360 = vand.u32 %v359, 4294901760
        %v361 = vsub.f32 %v359, %v360
        %v362 = vand.u32 %v361, 4294901760
        %363 = vmatpush.msra.mxu0 %v362
        %v364 = vand.u32 %v262, 4294901760
        %v365 = vsub.f32 %v262, %v364
        %v366 = vand.u32 %v365, 4294901760
        %v367 = vsub.f32 %v365, %v366
        %v368 = vand.u32 %v367, 4294901760
        %369 = vmatpush.msra.mxu0 %v368
        %v370 = vand.u32 %v261, 4294901760
        %v371 = vsub.f32 %v261, %v370
        %v372 = vand.u32 %v371, 4294901760
        %v373 = vsub.f32 %v371, %v372
        %v374 = vand.u32 %v373, 4294901760
        %375 = vmatpush.msra.mxu0 %v374
        %v376 = vand.u32 %v260, 4294901760
        %v377 = vsub.f32 %v260, %v376
        %v378 = vand.u32 %v377, 4294901760
        %v379 = vsub.f32 %v377, %v378
        %v380 = vand.u32 %v379, 4294901760
        %381 = vmatpush.msra.mxu0 %v380
        %v382 = vand.u32 %v259, 4294901760
        %v383 = vsub.f32 %v259, %v382
        %v384 = vand.u32 %v383, 4294901760
        %v385 = vsub.f32 %v383, %v384
        %v386 = vand.u32 %v385, 4294901760
        %387 = vmatpush.msra.mxu0 %v386
        %v388 = vand.u32 %v258, 4294901760
        %v389 = vsub.f32 %v258, %v388
        %v390 = vand.u32 %v389, 4294901760
        %v391 = vsub.f32 %v389, %v390
        %v392 = vand.u32 %v391, 4294901760
        %393 = vmatpush.msra.mxu0 %v392
        %v394 = vand.u32 %v257, 4294901760
        %v395 = vsub.f32 %v257, %v394
        %v396 = vand.u32 %v395, 4294901760
        %v397 = vsub.f32 %v395, %v396
        %v398 = vand.u32 %v397, 4294901760
        %399 = vmatpush.msra.mxu0 %v398
        %v400 = vand.u32 %v256, 4294901760
        %v401 = vsub.f32 %v256, %v400
        %v402 = vand.u32 %v401, 4294901760
        %v403 = vsub.f32 %v401, %v402
        %v404 = vand.u32 %v403, 4294901760
        %405 = vmatpush.msra.mxu0 %v404
        %v406 = vand.u32 %v255, 4294901760
        %v407 = vsub.f32 %v255, %v406
        %v408 = vand.u32 %v407, 4294901760
        %v409 = vsub.f32 %v407, %v408
        %v410 = vand.u32 %v409, 4294901760
        %411 = vmatpush.msra.mxu0 %v410
        %v412 = vand.u32 %v254, 4294901760
        %413 = vmatmul.f32.gmra.mxu0 %v412
        %v414 = vpop.f32.mrf.mxu0
        %v415 = vadd.f32 %v314, %v414
        %416 = vdwg.mxu0
        %v417 = vand.u32 %v270, 4294901760
        %v418 = vsub.f32 %v270, %v417
        %419 = vmatpush.msra.mxu0 %v418
        %v420 = vand.u32 %v269, 4294901760
        %v421 = vsub.f32 %v269, %v420
        %422 = vmatpush.msra.mxu0 %v421
        %v423 = vand.u32 %v268, 4294901760
        %v424 = vsub.f32 %v268, %v423
        %425 = vmatpush.msra.mxu0 %v424
        %v426 = vand.u32 %v267, 4294901760
        %v427 = vsub.f32 %v267, %v426
        %428 = vmatpush.msra.mxu0 %v427
        %v429 = vand.u32 %v266, 4294901760
        %v430 = vsub.f32 %v266, %v429
        %431 = vmatpush.msra.mxu0 %v430
        %v432 = vand.u32 %v265, 4294901760
        %v433 = vsub.f32 %v265, %v432
        %434 = vmatpush.msra.mxu0 %v433
        %v435 = vand.u32 %v264, 4294901760
        %v436 = vsub.f32 %v264, %v435
        %437 = vmatpush.msra.mxu0 %v436
        %v438 = vand.u32 %v263, 4294901760
        %v439 = vsub.f32 %v263, %v438
        %440 = vmatpush.msra.mxu0 %v439
        %v441 = vand.u32 %v262, 4294901760
        %v442 = vsub.f32 %v262, %v441
        %443 = vmatpush.msra.mxu0 %v442
        %v444 = vand.u32 %v261, 4294901760
        %v445 = vsub.f32 %v261, %v444
        %446 = vmatpush.msra.mxu0 %v445
        %v447 = vand.u32 %v260, 4294901760
        %v448 = vsub.f32 %v260, %v447
        %449 = vmatpush.msra.mxu0 %v448
        %v450 = vand.u32 %v259, 4294901760
        %v451 = vsub.f32 %v259, %v450
        %452 = vmatpush.msra.mxu0 %v451
        %v453 = vand.u32 %v258, 4294901760
        %v454 = vsub.f32 %v258, %v453
        %455 = vmatpush.msra.mxu0 %v454
        %v456 = vand.u32 %v257, 4294901760
        %v457 = vsub.f32 %v257, %v456
        %458 = vmatpush.msra.mxu0 %v457
        %v459 = vand.u32 %v256, 4294901760
        %v460 = vsub.f32 %v256, %v459
        %461 = vmatpush.msra.mxu0 %v460
        %v462 = vand.u32 %v255, 4294901760
        %v463 = vsub.f32 %v255, %v462
        %464 = vmatpush.msra.mxu0 %v463
        %v465 = vand.u32 %v254, 4294901760
        %v466 = vsub.f32 %v254, %v465
        %467 = vmatmul.f32.gmra.mxu0 %v466
        %v468 = vpop.f32.mrf.mxu0
        %v469 = vadd.f32 %v415, %v468
        %470 = vdwg.mxu0
        %v471 = vand.u32 %v270, 4294901760
        %472 = vmatpush.msra.mxu0 %v471
        %v473 = vand.u32 %v269, 4294901760
        %474 = vmatpush.msra.mxu0 %v473
        %v475 = vand.u32 %v268, 4294901760
        %476 = vmatpush.msra.mxu0 %v475
        %v477 = vand.u32 %v267, 4294901760
        %478 = vmatpush.msra.mxu0 %v477
        %v479 = vand.u32 %v266, 4294901760
        %480 = vmatpush.msra.mxu0 %v479
        %v481 = vand.u32 %v265, 4294901760
        %482 = vmatpush.msra.mxu0 %v481
        %v483 = vand.u32 %v264, 4294901760
        %484 = vmatpush.msra.mxu0 %v483
        %v485 = vand.u32 %v263, 4294901760
        %486 = vmatpush.msra.mxu0 %v485
        %v487 = vand.u32 %v262, 4294901760
        %488 = vmatpush.msra.mxu0 %v487
        %v489 = vand.u32 %v261, 4294901760
        %490 = vmatpush.msra.mxu0 %v489
        %v491 = vand.u32 %v260, 4294901760
        %492 = vmatpush.msra.mxu0 %v491
        %v493 = vand.u32 %v259, 4294901760
        %494 = vmatpush.msra.mxu0 %v493
        %v495 = vand.u32 %v258, 4294901760
        %496 = vmatpush.msra.mxu0 %v495
        %v497 = vand.u32 %v257, 4294901760
        %498 = vmatpush.msra.mxu0 %v497
        %v499 = vand.u32 %v256, 4294901760
        %500 = vmatpush.msra.mxu0 %v499
        %v501 = vand.u32 %v255, 4294901760
        %502 = vmatpush.msra.mxu0 %v501
        %v503 = vand.u32 %v254, 4294901760
        %v504 = vsub.f32 %v254, %v503
        %v505 = vand.u32 %v504, 4294901760
        %506 = vmatmul.f32.gmra.mxu0 %v505
        %v507 = vpop.f32.mrf.mxu0
        %v508 = vadd.f32 %v469, %v507
        %509 = vdwg.mxu0
        %v510 = vand.u32 %v270, 4294901760
        %v511 = vsub.f32 %v270, %v510
        %v512 = vand.u32 %v511, 4294901760
        %513 = vmatpush.msra.mxu0 %v512
        %v514 = vand.u32 %v269, 4294901760
        %v515 = vsub.f32 %v269, %v514
        %v516 = vand.u32 %v515, 4294901760
        %517 = vmatpush.msra.mxu0 %v516
        %v518 = vand.u32 %v268, 4294901760
        %v519 = vsub.f32 %v268, %v518
        %v520 = vand.u32 %v519, 4294901760
        %521 = vmatpush.msra.mxu0 %v520
        %v522 = vand.u32 %v267, 4294901760
        %v523 = vsub.f32 %v267, %v522
        %v524 = vand.u32 %v523, 4294901760
        %525 = vmatpush.msra.mxu0 %v524
        %v526 = vand.u32 %v266, 4294901760
        %v527 = vsub.f32 %v266, %v526
        %v528 = vand.u32 %v527, 4294901760
        %529 = vmatpush.msra.mxu0 %v528
        %v530 = vand.u32 %v265, 4294901760
        %v531 = vsub.f32 %v265, %v530
        %v532 = vand.u32 %v531, 4294901760
        %533 = vmatpush.msra.mxu0 %v532
        %v534 = vand.u32 %v264, 4294901760
        %v535 = vsub.f32 %v264, %v534
        %v536 = vand.u32 %v535, 4294901760
        %537 = vmatpush.msra.mxu0 %v536
        %v538 = vand.u32 %v263, 4294901760
        %v539 = vsub.f32 %v263, %v538
        %v540 = vand.u32 %v539, 4294901760
        %541 = vmatpush.msra.mxu0 %v540
        %v542 = vand.u32 %v262, 4294901760
        %v543 = vsub.f32 %v262, %v542
        %v544 = vand.u32 %v543, 4294901760
        %545 = vmatpush.msra.mxu0 %v544
        %v546 = vand.u32 %v261, 4294901760
        %v547 = vsub.f32 %v261, %v546
        %v548 = vand.u32 %v547, 4294901760
        %549 = vmatpush.msra.mxu0 %v548
        %v550 = vand.u32 %v260, 4294901760
        %v551 = vsub.f32 %v260, %v550
        %v552 = vand.u32 %v551, 4294901760
        %553 = vmatpush.msra.mxu0 %v552
        %v554 = vand.u32 %v259, 4294901760
        %v555 = vsub.f32 %v259, %v554
        %v556 = vand.u32 %v555, 4294901760
        %557 = vmatpush.msra.mxu0 %v556
        %v558 = vand.u32 %v258, 4294901760
        %v559 = vsub.f32 %v258, %v558
        %v560 = vand.u32 %v559, 4294901760
        %561 = vmatpush.msra.mxu0 %v560
        %v562 = vand.u32 %v257, 4294901760
        %v563 = vsub.f32 %v257, %v562
        %v564 = vand.u32 %v563, 4294901760
        %565 = vmatpush.msra.mxu0 %v564
        %v566 = vand.u32 %v256, 4294901760
        %v567 = vsub.f32 %v256, %v566
        %v568 = vand.u32 %v567, 4294901760
        %569 = vmatpush.msra.mxu0 %v568
        %v570 = vand.u32 %v255, 4294901760
        %v571 = vsub.f32 %v255, %v570
        %v572 = vand.u32 %v571, 4294901760
        %573 = vmatpush.msra.mxu0 %v572
        %v574 = vand.u32 %v254, 4294901760
        %575 = vmatmul.f32.gmra.mxu0 %v574
        %v576 = vpop.f32.mrf.mxu0
        %v577 = vadd.f32 %v508, %v576
        %578 = vdwg.mxu0
        %v579 = vand.u32 %v270, 4294901760
        %580 = vmatpush.msra.mxu0 %v579
        %v581 = vand.u32 %v269, 4294901760
        %582 = vmatpush.msra.mxu0 %v581
        %v583 = vand.u32 %v268, 4294901760
        %584 = vmatpush.msra.mxu0 %v583
        %v585 = vand.u32 %v267, 4294901760
        %586 = vmatpush.msra.mxu0 %v585
        %v587 = vand.u32 %v266, 4294901760
        %588 = vmatpush.msra.mxu0 %v587
        %v589 = vand.u32 %v265, 4294901760
        %590 = vmatpush.msra.mxu0 %v589
        %v591 = vand.u32 %v264, 4294901760
        %592 = vmatpush.msra.mxu0 %v591
        %v593 = vand.u32 %v263, 4294901760
        %594 = vmatpush.msra.mxu0 %v593
        %v595 = vand.u32 %v262, 4294901760
        %596 = vmatpush.msra.mxu0 %v595
        %v597 = vand.u32 %v261, 4294901760
        %598 = vmatpush.msra.mxu0 %v597
        %v599 = vand.u32 %v260, 4294901760
        %600 = vmatpush.msra.mxu0 %v599
        %v601 = vand.u32 %v259, 4294901760
        %602 = vmatpush.msra.mxu0 %v601
        %v603 = vand.u32 %v258, 4294901760
        %604 = vmatpush.msra.mxu0 %v603
        %v605 = vand.u32 %v257, 4294901760
        %606 = vmatpush.msra.mxu0 %v605
        %v607 = vand.u32 %v256, 4294901760
        %608 = vmatpush.msra.mxu0 %v607
        %v609 = vand.u32 %v255, 4294901760
        %610 = vmatpush.msra.mxu0 %v609
        %v611 = vand.u32 %v254, 4294901760
        %612 = vmatmul.f32.gmra.mxu0 %v611
        %v613 = vpop.f32.mrf.mxu0
        %v614 = vadd.f32 %v577, %v613
        %615 = vdwg.mxu0
        %v616 = vmax.f32 %v614, 0.0
        %v617 = vld [vmem:[#allocation4] sm:$0xff]
        %v618 = vld [vmem:[#allocation4 + $0x8] sm:$0xff]
        %v619 = vld [vmem:[#allocation4 + $0x10] sm:$0xff]
        %v620 = vld [vmem:[#allocation4 + $0x18] sm:$0xff]
        %v621 = vld [vmem:[#allocation4 + $0x20] sm:$0xff]
        %v622 = vld [vmem:[#allocation4 + $0x28] sm:$0xff]
        %v623 = vld [vmem:[#allocation4 + $0x30] sm:$0xff]
        %v624 = vld [vmem:[#allocation4 + $0x38] sm:$0xff]
        %v625 = vld [vmem:[#allocation4 + $0x40] sm:$0xff]
        %v626 = vld [vmem:[#allocation4 + $0x48] sm:$0xff]
        %v627 = vld [vmem:[#allocation4 + $0x50] sm:$0xff]
        %v628 = vld [vmem:[#allocation4 + $0x58] sm:$0xff]
        %v629 = vld [vmem:[#allocation4 + $0x60] sm:$0xff]
        %v630 = vld [vmem:[#allocation4 + $0x68] sm:$0xff]
        %v631 = vld [vmem:[#allocation4 + $0x70] sm:$0xff]
        %v632 = vld [vmem:[#allocation4 + $0x78] sm:$0xff]
        %v633 = vld [vmem:[%s4] sm:$0x1]
        %v635 = vperm.slane %v633, 0
        %v637 = vand.u32 %v632, 4294901760
        %638 = vmatpush.msra.mxu0 %v637
        %v639 = vand.u32 %v631, 4294901760
        %640 = vmatpush.msra.mxu0 %v639
        %v641 = vand.u32 %v630, 4294901760
        %642 = vmatpush.msra.mxu0 %v641
        %v643 = vand.u32 %v629, 4294901760
        %644 = vmatpush.msra.mxu0 %v643
        %v645 = vand.u32 %v628, 4294901760
        %646 = vmatpush.msra.mxu0 %v645
        %v647 = vand.u32 %v627, 4294901760
        %648 = vmatpush.msra.mxu0 %v647
        %v649 = vand.u32 %v626, 4294901760
        %650 = vmatpush.msra.mxu0 %v649
        %v651 = vand.u32 %v625, 4294901760
        %652 = vmatpush.msra.mxu0 %v651
        %v653 = vand.u32 %v624, 4294901760
        %654 = vmatpush.msra.mxu0 %v653
        %v655 = vand.u32 %v623, 4294901760
        %656 = vmatpush.msra.mxu0 %v655
        %v657 = vand.u32 %v622, 4294901760
        %658 = vmatpush.msra.mxu0 %v657
        %v659 = vand.u32 %v621, 4294901760
        %660 = vmatpush.msra.mxu0 %v659
        %v661 = vand.u32 %v620, 4294901760
        %662 = vmatpush.msra.mxu0 %v661
        %v663 = vand.u32 %v619, 4294901760
        %664 = vmatpush.msra.mxu0 %v663
        %v665 = vand.u32 %v618, 4294901760
        %666 = vmatpush.msra.mxu0 %v665
        %v667 = vand.u32 %v617, 4294901760
        %668 = vmatpush.msra.mxu0 %v667
        %v669 = vand.u32 %v616, 4294901760
        %v670 = vsub.f32 %v616, %v669
        %v671 = vand.u32 %v670, 4294901760
        %v672 = vsub.f32 %v670, %v671
        %v673 = vand.u32 %v672, 4294901760
        %674 = vmatmul.f32.gmra.mxu0 %v673
        %v675 = vpop.f32.mrf.mxu0
        %v676 = vadd.f32 %v635, %v675
        %677 = vdwg.mxu0
        %v678 = vand.u32 %v632, 4294901760
        %v679 = vsub.f32 %v632, %v678
        %v680 = vand.u32 %v679, 4294901760
        %v681 = vsub.f32 %v679, %v680
        %v682 = vand.u32 %v681, 4294901760
        %683 = vmatpush.msra.mxu0 %v682
        %v684 = vand.u32 %v631, 4294901760
        %v685 = vsub.f32 %v631, %v684
        %v686 = vand.u32 %v685, 4294901760
        %v687 = vsub.f32 %v685, %v686
        %v688 = vand.u32 %v687, 4294901760
        %689 = vmatpush.msra.mxu0 %v688
        %v690 = vand.u32 %v630, 4294901760
        %v691 = vsub.f32 %v630, %v690
        %v692 = vand.u32 %v691, 4294901760
        %v693 = vsub.f32 %v691, %v692
        %v694 = vand.u32 %v693, 4294901760
        %695 = vmatpush.msra.mxu0 %v694
        %v696 = vand.u32 %v629, 4294901760
        %v697 = vsub.f32 %v629, %v696
        %v698 = vand.u32 %v697, 4294901760
        %v699 = vsub.f32 %v697, %v698
        %v700 = vand.u32 %v699, 4294901760
        %701 = vmatpush.msra.mxu0 %v700
        %v702 = vand.u32 %v628, 4294901760
        %v703 = vsub.f32 %v628, %v702
        %v704 = vand.u32 %v703, 4294901760
        %v705 = vsub.f32 %v703, %v704
        %v706 = vand.u32 %v705, 4294901760
        %707 = vmatpush.msra.mxu0 %v706
        %v708 = vand.u32 %v627, 4294901760
        %v709 = vsub.f32 %v627, %v708
        %v710 = vand.u32 %v709, 4294901760
        %v711 = vsub.f32 %v709, %v710
        %v712 = vand.u32 %v711, 4294901760
        %713 = vmatpush.msra.mxu0 %v712
        %v714 = vand.u32 %v626, 4294901760
        %v715 = vsub.f32 %v626, %v714
        %v716 = vand.u32 %v715, 4294901760
        %v717 = vsub.f32 %v715, %v716
        %v718 = vand.u32 %v717, 4294901760
        %719 = vmatpush.msra.mxu0 %v718
        %v720 = vand.u32 %v625, 4294901760
        %v721 = vsub.f32 %v625, %v720
        %v722 = vand.u32 %v721, 4294901760
        %v723 = vsub.f32 %v721, %v722
        %v724 = vand.u32 %v723, 4294901760
        %725 = vmatpush.msra.mxu0 %v724
        %v726 = vand.u32 %v624, 4294901760
        %v727 = vsub.f32 %v624, %v726
        %v728 = vand.u32 %v727, 4294901760
        %v729 = vsub.f32 %v727, %v728
        %v730 = vand.u32 %v729, 4294901760
        %731 = vmatpush.msra.mxu0 %v730
        %v732 = vand.u32 %v623, 4294901760
        %v733 = vsub.f32 %v623, %v732
        %v734 = vand.u32 %v733, 4294901760
        %v735 = vsub.f32 %v733, %v734
        %v736 = vand.u32 %v735, 4294901760
        %737 = vmatpush.msra.mxu0 %v736
        %v738 = vand.u32 %v622, 4294901760
        %v739 = vsub.f32 %v622, %v738
        %v740 = vand.u32 %v739, 4294901760
        %v741 = vsub.f32 %v739, %v740
        %v742 = vand.u32 %v741, 4294901760
        %743 = vmatpush.msra.mxu0 %v742
        %v744 = vand.u32 %v621, 4294901760
        %v745 = vsub.f32 %v621, %v744
        %v746 = vand.u32 %v745, 4294901760
        %v747 = vsub.f32 %v745, %v746
        %v748 = vand.u32 %v747, 4294901760
        %749 = vmatpush.msra.mxu0 %v748
        %v750 = vand.u32 %v620, 4294901760
        %v751 = vsub.f32 %v620, %v750
        %v752 = vand.u32 %v751, 4294901760
        %v753 = vsub.f32 %v751, %v752
        %v754 = vand.u32 %v753, 4294901760
        %755 = vmatpush.msra.mxu0 %v754
        %v756 = vand.u32 %v619, 4294901760
        %v757 = vsub.f32 %v619, %v756
        %v758 = vand.u32 %v757, 4294901760
        %v759 = vsub.f32 %v757, %v758
        %v760 = vand.u32 %v759, 4294901760
        %761 = vmatpush.msra.mxu0 %v760
        %v762 = vand.u32 %v618, 4294901760
        %v763 = vsub.f32 %v618, %v762
        %v764 = vand.u32 %v763, 4294901760
        %v765 = vsub.f32 %v763, %v764
        %v766 = vand.u32 %v765, 4294901760
        %767 = vmatpush.msra.mxu0 %v766
        %v768 = vand.u32 %v617, 4294901760
        %v769 = vsub.f32 %v617, %v768
        %v770 = vand.u32 %v769, 4294901760
        %v771 = vsub.f32 %v769, %v770
        %v772 = vand.u32 %v771, 4294901760
        %773 = vmatpush.msra.mxu0 %v772
        %v774 = vand.u32 %v616, 4294901760
        %775 = vmatmul.f32.gmra.mxu0 %v774
        %v776 = vpop.f32.mrf.mxu0
        %v777 = vadd.f32 %v676, %v776
        %778 = vdwg.mxu0
        %v779 = vand.u32 %v632, 4294901760
        %v780 = vsub.f32 %v632, %v779
        %781 = vmatpush.msra.mxu0 %v780
        %v782 = vand.u32 %v631, 4294901760
        %v783 = vsub.f32 %v631, %v782
        %784 = vmatpush.msra.mxu0 %v783
        %v785 = vand.u32 %v630, 4294901760
        %v786 = vsub.f32 %v630, %v785
        %787 = vmatpush.msra.mxu0 %v786
        %v788 = vand.u32 %v629, 4294901760
        %v789 = vsub.f32 %v629, %v788
        %790 = vmatpush.msra.mxu0 %v789
        %v791 = vand.u32 %v628, 4294901760
        %v792 = vsub.f32 %v628, %v791
        %793 = vmatpush.msra.mxu0 %v792
        %v794 = vand.u32 %v627, 4294901760
        %v795 = vsub.f32 %v627, %v794
        %796 = vmatpush.msra.mxu0 %v795
        %v797 = vand.u32 %v626, 4294901760
        %v798 = vsub.f32 %v626, %v797
        %799 = vmatpush.msra.mxu0 %v798
        %v800 = vand.u32 %v625, 4294901760
        %v801 = vsub.f32 %v625, %v800
        %802 = vmatpush.msra.mxu0 %v801
        %v803 = vand.u32 %v624, 4294901760
        %v804 = vsub.f32 %v624, %v803
        %805 = vmatpush.msra.mxu0 %v804
        %v806 = vand.u32 %v623, 4294901760
        %v807 = vsub.f32 %v623, %v806
        %808 = vmatpush.msra.mxu0 %v807
        %v809 = vand.u32 %v622, 4294901760
        %v810 = vsub.f32 %v622, %v809
        %811 = vmatpush.msra.mxu0 %v810
        %v812 = vand.u32 %v621, 4294901760
        %v813 = vsub.f32 %v621, %v812
        %814 = vmatpush.msra.mxu0 %v813
        %v815 = vand.u32 %v620, 4294901760
        %v816 = vsub.f32 %v620, %v815
        %817 = vmatpush.msra.mxu0 %v816
        %v818 = vand.u32 %v619, 4294901760
        %v819 = vsub.f32 %v619, %v818
        %820 = vmatpush.msra.mxu0 %v819
        %v821 = vand.u32 %v618, 4294901760
        %v822 = vsub.f32 %v618, %v821
        %823 = vmatpush.msra.mxu0 %v822
        %v824 = vand.u32 %v617, 4294901760
        %v825 = vsub.f32 %v617, %v824
        %826 = vmatpush.msra.mxu0 %v825
        %v827 = vand.u32 %v616, 4294901760
        %v828 = vsub.f32 %v616, %v827
        %829 = vmatmul.f32.gmra.mxu0 %v828
        %v830 = vpop.f32.mrf.mxu0
        %v831 = vadd.f32 %v777, %v830
        %832 = vdwg.mxu0
        %v833 = vand.u32 %v632, 4294901760
        %834 = vmatpush.msra.mxu0 %v833
        %v835 = vand.u32 %v631, 4294901760
        %836 = vmatpush.msra.mxu0 %v835
        %v837 = vand.u32 %v630, 4294901760
        %838 = vmatpush.msra.mxu0 %v837
        %v839 = vand.u32 %v629, 4294901760
        %840 = vmatpush.msra.mxu0 %v839
        %v841 = vand.u32 %v628, 4294901760
        %842 = vmatpush.msra.mxu0 %v841
        %v843 = vand.u32 %v627, 4294901760
        %844 = vmatpush.msra.mxu0 %v843
        %v845 = vand.u32 %v626, 4294901760
        %846 = vmatpush.msra.mxu0 %v845
        %v847 = vand.u32 %v625, 4294901760
        %848 = vmatpush.msra.mxu0 %v847
        %v849 = vand.u32 %v624, 4294901760
        %850 = vmatpush.msra.mxu0 %v849
        %v851 = vand.u32 %v623, 4294901760
        %852 = vmatpush.msra.mxu0 %v851
        %v853 = vand.u32 %v622, 4294901760
        %854 = vmatpush.msra.mxu0 %v853
        %v855 = vand.u32 %v621, 4294901760
        %856 = vmatpush.msra.mxu0 %v855
        %v857 = vand.u32 %v620, 4294901760
        %858 = vmatpush.msra.mxu0 %v857
        %v859 = vand.u32 %v619, 4294901760
        %860 = vmatpush.msra.mxu0 %v859
        %v861 = vand.u32 %v618, 4294901760
        %862 = vmatpush.msra.mxu0 %v861
        %v863 = vand.u32 %v617, 4294901760
        %864 = vmatpush.msra.mxu0 %v863
        %v865 = vand.u32 %v616, 4294901760
        %v866 = vsub.f32 %v616, %v865
        %v867 = vand.u32 %v866, 4294901760
        %868 = vmatmul.f32.gmra.mxu0 %v867
        %v869 = vpop.f32.mrf.mxu0
        %v870 = vadd.f32 %v831, %v869
        %871 = vdwg.mxu0
        %v872 = vand.u32 %v632, 4294901760
        %v873 = vsub.f32 %v632, %v872
        %v874 = vand.u32 %v873, 4294901760
        %875 = vmatpush.msra.mxu0 %v874
        %v876 = vand.u32 %v631, 4294901760
        %v877 = vsub.f32 %v631, %v876
        %v878 = vand.u32 %v877, 4294901760
        %879 = vmatpush.msra.mxu0 %v878
        %v880 = vand.u32 %v630, 4294901760
        %v881 = vsub.f32 %v630, %v880
        %v882 = vand.u32 %v881, 4294901760
        %883 = vmatpush.msra.mxu0 %v882
        %v884 = vand.u32 %v629, 4294901760
        %v885 = vsub.f32 %v629, %v884
        %v886 = vand.u32 %v885, 4294901760
        %887 = vmatpush.msra.mxu0 %v886
        %v888 = vand.u32 %v628, 4294901760
        %v889 = vsub.f32 %v628, %v888
        %v890 = vand.u32 %v889, 4294901760
        %891 = vmatpush.msra.mxu0 %v890
        %v892 = vand.u32 %v627, 4294901760
        %v893 = vsub.f32 %v627, %v892
        %v894 = vand.u32 %v893, 4294901760
        %895 = vmatpush.msra.mxu0 %v894
        %v896 = vand.u32 %v626, 4294901760
        %v897 = vsub.f32 %v626, %v896
        %v898 = vand.u32 %v897, 4294901760
        %899 = vmatpush.msra.mxu0 %v898
        %v900 = vand.u32 %v625, 4294901760
        %v901 = vsub.f32 %v625, %v900
        %v902 = vand.u32 %v901, 4294901760
        %903 = vmatpush.msra.mxu0 %v902
        %v904 = vand.u32 %v624, 4294901760
        %v905 = vsub.f32 %v624, %v904
        %v906 = vand.u32 %v905, 4294901760
        %907 = vmatpush.msra.mxu0 %v906
        %v908 = vand.u32 %v623, 4294901760
        %v909 = vsub.f32 %v623, %v908
        %v910 = vand.u32 %v909, 4294901760
        %911 = vmatpush.msra.mxu0 %v910
        %v912 = vand.u32 %v622, 4294901760
        %v913 = vsub.f32 %v622, %v912
        %v914 = vand.u32 %v913, 4294901760
        %915 = vmatpush.msra.mxu0 %v914
        %v916 = vand.u32 %v621, 4294901760
        %v917 = vsub.f32 %v621, %v916
        %v918 = vand.u32 %v917, 4294901760
        %919 = vmatpush.msra.mxu0 %v918
        %v920 = vand.u32 %v620, 4294901760
        %v921 = vsub.f32 %v620, %v920
        %v922 = vand.u32 %v921, 4294901760
        %923 = vmatpush.msra.mxu0 %v922
        %v924 = vand.u32 %v619, 4294901760
        %v925 = vsub.f32 %v619, %v924
        %v926 = vand.u32 %v925, 4294901760
        %927 = vmatpush.msra.mxu0 %v926
        %v928 = vand.u32 %v618, 4294901760
        %v929 = vsub.f32 %v618, %v928
        %v930 = vand.u32 %v929, 4294901760
        %931 = vmatpush.msra.mxu0 %v930
        %v932 = vand.u32 %v617, 4294901760
        %v933 = vsub.f32 %v617, %v932
        %v934 = vand.u32 %v933, 4294901760
        %935 = vmatpush.msra.mxu0 %v934
        %v936 = vand.u32 %v616, 4294901760
        %937 = vmatmul.f32.gmra.mxu0 %v936
        %v938 = vpop.f32.mrf.mxu0
        %v939 = vadd.f32 %v870, %v938
        %940 = vdwg.mxu0
        %v941 = vand.u32 %v632, 4294901760
        %942 = vmatpush.msra.mxu0 %v941
        %v943 = vand.u32 %v631, 4294901760
        %944 = vmatpush.msra.mxu0 %v943
        %v945 = vand.u32 %v630, 4294901760
        %946 = vmatpush.msra.mxu0 %v945
        %v947 = vand.u32 %v629, 4294901760
        %948 = vmatpush.msra.mxu0 %v947
        %v949 = vand.u32 %v628, 4294901760
        %950 = vmatpush.msra.mxu0 %v949
        %v951 = vand.u32 %v627, 4294901760
        %952 = vmatpush.msra.mxu0 %v951
        %v953 = vand.u32 %v626, 4294901760
        %954 = vmatpush.msra.mxu0 %v953
        %v955 = vand.u32 %v625, 4294901760
        %956 = vmatpush.msra.mxu0 %v955
        %v957 = vand.u32 %v624, 4294901760
        %958 = vmatpush.msra.mxu0 %v957
        %v959 = vand.u32 %v623, 4294901760
        %960 = vmatpush.msra.mxu0 %v959
        %v961 = vand.u32 %v622, 4294901760
        %962 = vmatpush.msra.mxu0 %v961
        %v963 = vand.u32 %v621, 4294901760
        %964 = vmatpush.msra.mxu0 %v963
        %v965 = vand.u32 %v620, 4294901760
        %966 = vmatpush.msra.mxu0 %v965
        %v967 = vand.u32 %v619, 4294901760
        %968 = vmatpush.msra.mxu0 %v967
        %v969 = vand.u32 %v618, 4294901760
        %970 = vmatpush.msra.mxu0 %v969
        %v971 = vand.u32 %v617, 4294901760
        %972 = vmatpush.msra.mxu0 %v971
        %v973 = vand.u32 %v616, 4294901760
        %974 = vmatmul.f32.gmra.mxu0 %v973
        %v975 = vpop.f32.mrf.mxu0
        %v976 = vadd.f32 %v939, %v975
        %977 = vdwg.mxu0
        %978 = vst [vmem:[%s253] sm:$0xff] %v976
        %p979 = scmp.lt.s32.totalorder %s18, 1
        %s980 = scalar_select %p979, %s18, 1
        %s981 = smul.addr %s980, 8
        %s982 = scalar_lea.vmem %s5, %s981
        // Predicated region
        $region49: #{apply.1} parent=39 // pred_check
          %p983 = pneg %p146
        $region50: #{apply.1} parent=39 // pred_check_branch
          %985 = sbr.rel (%p983) target = $region52
        $region51: #{apply.1} parent=39 // pred_region
          _
        $region52: #{apply.1} parent=39 // pred_fallthru
          _
      $region40: #{apply.1} parent=5 // pred_fallthru
        _
      %p986 = scmp.le.s32.totalorder 2, %s13
      // Predicated region
      $region53: #{apply.1} parent=5 // pred_check
        %p987 = pneg %p986
      $region54: #{apply.1} parent=5 // pred_check_branch
        %989 = sbr.rel (%p987) target = $region56
      $region55: #{apply.1} parent=5 // pred_region
        %s990 = ssub.s32 %s13, 2
        // Predicated region
        $region57: #{apply.1} parent=55 // pred_check
          %p991 = pneg %p152
        $region58: #{apply.1} parent=55 // pred_check_branch
          %993 = sbr.rel (%p991) target = $region60
        $region59: #{apply.1} parent=55 // pred_region
          %p994 = scmp.lt.s32.totalorder %s19, 1
          %s995 = scalar_select %p994, %s19, 1
          %s996 = smul.addr %s995, 8
          %s997 = scalar_lea.vmem %s5, %s996
        $region60: #{apply.1} parent=55 // pred_fallthru
          _
      $region56: #{apply.1} parent=5 // pred_fallthru
        _
    $region6: #{apply.1} parent=1 // loop_footer
      %s17 = sadd.s32 1, %s13
    $region7: #{apply.1} parent=1 // loop_footer_branch
      %12 = sbr.rel target = $region3
    $region8: #{apply.1} parent=1 // loop_exit
      _
    %998 = vsyncpa [#allocation3], 1
    %s999 = scalar_lea.sflag [#allocation3], 1
    %1000 = vsyncpa %s999, 1
    %1001 = vsyncpa [#allocation5], 1

</llo_original>
